<compile_context>
chip_gen: v7x
topology: tpu7x:2x2x1
jax: 0.10.0
libtpu: 0.0.40
codegen_flags: <defaults>
</compile_context>

<pallas_src>
import functools

import jax
import jax.numpy as jnp
from jax.experimental import pallas as pl
from jax.experimental.pallas import tpu as pltpu

_EPS = 1e-8


def _round_up(x, m):
    return ((x + m - 1) // m) * m


def _cdiv(a, b):
    return -(-a // b)


@functools.lru_cache(maxsize=None)
def _vmem_limit():
    """Scoped-VMEM limit derived from the chip (v7x: 64 MiB physical, v5e/v6e: 128 MiB)."""
    try:
        cap = int(pltpu.get_tpu_info().vmem_capacity_bytes)
    except Exception:  # off-TPU / API drift: fall back to a conservative value
        cap = 64 * 1024 * 1024
    return max(32 * 1024 * 1024, min(int(cap * 0.6), 100 * 1024 * 1024))


# ----------------------------------------------------------------------------------------------
# Fused small/medium-N kernel: CE + cosine sim + positive/negative pair losses in one call.
# ----------------------------------------------------------------------------------------------
def _make_fused_loss_kernel(n_negative):
    def kernel(logits_ref, labels_ref, weights_ref, x_ref, out_ref):
        f32 = jnp.float32
        bf16 = jnp.bfloat16

        # ---- weighted cross entropy (PyTorch reduction='mean' semantics) ----
        logits = logits_ref[...].astype(f32)                     # (N, C), cast in-kernel
        labels = labels_ref[...]                                 # (N, 1) int32
        w = weights_ref[...]                                     # (1, C) f32
        n, c = logits.shape
        cls_ids = jax.lax.broadcasted_iota(jnp.int32, (n, c), 1)
        onehot = (cls_ids == labels).astype(f32)                 # (N, C)
        m = jnp.max(logits, axis=1, keepdims=True)
        lse = m + jnp.log(jnp.sum(jnp.exp(logits - m), axis=1, keepdims=True))
        true_logit = jnp.sum(logits * onehot, axis=1, keepdims=True)
        nll = lse - true_logit                                   # (N, 1)
        sample_w = jnp.sum(onehot * w, axis=1, keepdims=True)    # weight[y_i]
        loss_ce = jnp.sum(sample_w * nll) / jnp.sum(sample_w)

        # ---- pairwise cosine similarity: per-vector eps clamp (EUP rsqrt), bf16 MXU gram ----
        xf = x_ref[...].astype(f32)                              # (N, D)
        sq = jnp.sum(xf * xf, axis=1, keepdims=True)             # (N, 1)
        inv = jax.lax.rsqrt(jnp.maximum(sq, _EPS * _EPS))        # 1 / max(||x_i||, eps)
        xn = (xf * inv).astype(bf16)
        sim = jax.lax.dot_general(xn, xn, (((1,), (1,)), ((), ())),
                                  preferred_element_type=f32)    # (N, N) cosine similarities

        # ---- pair masks: combinations(range(N), 2) == upper triangle in row-major order ----
        i_ids = jax.lax.broadcasted_iota(jnp.int32, (n, n), 0)
        j_ids = jax.lax.broadcasted_iota(jnp.int32, (n, n), 1)
        upper = i_ids < j_ids
        # same-label mask from the CE onehot; bf16 0/1 operands keep it exact and at MXU rate.
        onehot_bf = onehot.astype(bf16)
        same = jax.lax.dot_general(onehot_bf, onehot_bf, (((1,), (1,)), ((), ())),
                                   preferred_element_type=f32) > 0.5

        # positive pairs: same label, i < j; loss = mean(1 - cos_sim)
        pos_mask = upper & same
        n_pos = jnp.sum(pos_mask.astype(f32))
        pos_sum = jnp.sum(jnp.where(pos_mask, 1.0 - sim, 0.0))
        loss_pos = jnp.where(n_pos > 0.0, pos_sum / jnp.maximum(n_pos, 1.0), 0.0)

        # negative pairs: different label, first n_negative in combinations order;
        # loss = mean(max(0, cos_sim)).  Row-major rank via ONE bf16 N^3 matmul (exact 0/1
        # arithmetic, f32 acc) plus a tiny N^2 f32 mat-vec -- the old N^3 "prior" matmul and the
        # separate row reduce are gone.
        neg_mask = upper & jnp.logical_not(same)
        neg_bf = neg_mask.astype(f32).astype(bf16)
        lte_f = (i_ids <= j_ids).astype(f32)
        rowcum = jax.lax.dot_general(neg_bf, lte_f.astype(bf16), (((1,), (0,)), ((), ())),
                                     preferred_element_type=f32)  # negs in row i at cols <= j
        rowcount = rowcum[:, n - 1:n]                             # (N, 1) negs per row (exact)
        inclusive = jax.lax.dot_general(lte_f, rowcount, (((0,), (0,)), ((), ())),
                                        preferred_element_type=f32)  # negs in rows <= i
        rank = (inclusive - rowcount) + rowcum                    # 1-based row-major rank
        sel = neg_mask & (rank <= (n_negative + 0.5))
        n_sel = jnp.sum(sel.astype(f32))
        neg_sum = jnp.sum(jnp.where(sel, jnp.maximum(sim, 0.0), 0.0))
        loss_neg = jnp.where(n_sel > 0.0, neg_sum / jnp.maximum(n_sel, 1.0), 0.0)

        out_ref[0, 0] = loss_ce + loss_pos + loss_neg

    return kernel


def fused_contrastive_loss_pallas(xs, y_preds, y_true, class_weight, n_negative):
    n, c = y_preds.shape
    out = pl.pallas_call(
        _make_fused_loss_kernel(int(n_negative)),
        out_shape=jax.ShapeDtypeStruct((1, 1), jnp.float32),
        in_specs=[pl.BlockSpec(memory_space=pltpu.MemorySpace.VMEM)] * 4,
        out_specs=pl.BlockSpec(memory_space=pltpu.MemorySpace.SMEM),
        compiler_params=pltpu.CompilerParams(vmem_limit_bytes=_vmem_limit()),
    )(
        y_preds,                                        # native dtype; cast to f32 in-kernel
        y_true.reshape(n, 1).astype(jnp.int32),
        class_weight.reshape(1, c).astype(jnp.float32),
        xs,                                             # native dtype; normalized in-kernel
    )
    return out[0, 0]


# ----------------------------------------------------------------------------------------------
# Grid-tiled weighted cross-entropy (CE-only path / large N).
# ----------------------------------------------------------------------------------------------
def _ce_kernel_tiled(logits_ref, labels_ref, weights_ref, out_ref, acc_ref, *,
                     n_valid, tiles_per_split):
    p = pl.program_id(0)                                          # core-split axis ("parallel")
    t = pl.program_id(1)                                          # reduction axis ("arbitrary")

    @pl.when(t == 0)
    def _init():
        acc_ref[0] = jnp.float32(0.0)                             # num: sum(w_i * nll_i)
        acc_ref[1] = jnp.float32(0.0)                             # den: sum(w_i)

    logits = logits_ref[...].astype(jnp.float32)                  # (tm, C), cast in-kernel
    labels = labels_ref[...]                                      # (tm, 1) int32
    w = weights_ref[...]                                          # (1, C) f32
    tm, c = logits.shape
    # rows covered by this (p, t) tile; partial / clamped-duplicate tiles are masked out.
    row = (p * tiles_per_split + t) * tm + jax.lax.broadcasted_iota(jnp.int32, (tm, 1), 0)
    valid = row < n_valid
    cls_ids = jax.lax.broadcasted_iota(jnp.int32, (tm, c), 1)
    onehot = (cls_ids == labels).astype(jnp.float32)
    m = jnp.max(logits, axis=1, keepdims=True)
    lse = m + jnp.log(jnp.sum(jnp.exp(logits - m), axis=1, keepdims=True))
    true_logit = jnp.sum(logits * onehot, axis=1, keepdims=True)
    nll = lse - true_logit
    sample_w = jnp.sum(onehot * w, axis=1, keepdims=True)
    acc_ref[0] = acc_ref[0] + jnp.sum(jnp.where(valid, sample_w * nll, 0.0))
    acc_ref[1] = acc_ref[1] + jnp.sum(jnp.where(valid, sample_w, 0.0))

    @pl.when(t == pl.num_programs(1) - 1)
    def _finalize():
        # write [num, den] for this split into lanes 0/1 of an (8,128)-aligned output block.
        sub = jax.lax.broadcasted_iota(jnp.int32, (1, 8, 128), 1)
        lane = jax.lax.broadcasted_iota(jnp.int32, (1, 8, 128), 2)
        out_ref[...] = jnp.where((sub == 0) & (lane == 0), acc_ref[0],
                                 jnp.where((sub == 0) & (lane == 1), acc_ref[1], 0.0))


def cross_entropy_pallas(logits, labels, class_weight, *, max_rows_per_tile=1024):
    """F.cross_entropy(y_preds, y_true, weight=w, reduction='mean'), grid-tiled over the batch."""
    n, c = logits.shape
    tm = min(max_rows_per_tile, _round_up(n, 8))
    n_tiles = _cdiv(n, tm)
    n_split = 2 if n_tiles >= 2 else 1            # spread the reduction over both v7x TensorCores
    tps = _cdiv(n_tiles, n_split)
    labels2 = labels.astype(jnp.int32).reshape(n, 1)
    w = class_weight.reshape(1, c).astype(jnp.float32)

    def _row_block(p, t):
        # clamp so trailing (p, t) pairs re-read the last tile; their rows are masked in-kernel.
        return (jnp.minimum(p * tps + t, n_tiles - 1), 0)

    parts = pl.pallas_call(
        functools.partial(_ce_kernel_tiled, n_valid=n, tiles_per_split=tps),
        out_shape=jax.ShapeDtypeStruct((n_split, 8, 128), jnp.float32),
        grid=(n_split, tps),
        in_specs=[
            pl.BlockSpec((tm, c), _row_block),            # logits, native dtype (no host pad/cast)
            pl.BlockSpec((tm, 1), _row_block),            # labels
            pl.BlockSpec((1, c), lambda p, t: (0, 0)),    # class weights
        ],
        out_specs=pl.BlockSpec((1, 8, 128), lambda p, t: (p, 0, 0)),
        scratch_shapes=[pltpu.SMEM((2,), jnp.float32)],   # scalar num/den accumulators
        compiler_params=pltpu.CompilerParams(
            dimension_semantics=("parallel", "arbitrary"),
            vmem_limit_bytes=_vmem_limit()),
    )(logits, labels2, w)
    return jnp.sum(parts[:, 0, 0]) / jnp.sum(parts[:, 0, 1])


# ----------------------------------------------------------------------------------------------
# Grid-tiled pairwise cosine similarity (large-N path).
# ----------------------------------------------------------------------------------------------
def _cosine_sim_tile_kernel(xr_ref, xc_ref, sim_ref):
    gram = jax.lax.dot_general(xr_ref[...], xc_ref[...], (((1,), (1,)), ((), ())),
                               preferred_element_type=jnp.float32)  # bf16 MXU, f32 accumulate
    sim_ref[...] = gram.astype(sim_ref.dtype)


def cosine_sim_matrix_pallas(xs, *, tile=256, out_dtype=jnp.bfloat16):
    """Pairwise cosine similarity of rows of xs (per-vector eps clamp, PyTorch semantics)."""
    n, d = xs.shape
    xf = xs.astype(jnp.float32)
    sq = jnp.sum(xf * xf, axis=1, keepdims=True)
    inv = jax.lax.rsqrt(jnp.maximum(sq, _EPS * _EPS))               # 1 / max(||x_i||, eps)
    xn = (xf * inv).astype(jnp.bfloat16)                            # normalize once, bf16 operand
    n_pad = _round_up(n, tile)
    if n_pad != n:
        xn = jnp.pad(xn, ((0, n_pad - n), (0, 0)))                  # zero rows -> zero sim, sliced

    sim = pl.pallas_call(
        _cosine_sim_tile_kernel,
        out_shape=jax.ShapeDtypeStruct((n_pad, n_pad), out_dtype),  # bf16: halves HBM writeback
        grid=(n_pad // tile, n_pad // tile),
        in_specs=[
            pl.BlockSpec((tile, d), lambda i, j: (i, 0)),           # row panel of normalized x
            pl.BlockSpec((tile, d), lambda i, j: (j, 0)),           # col panel of normalized x
        ],
        out_specs=pl.BlockSpec((tile, tile), lambda i, j: (i, j)),
        compiler_params=pltpu.CompilerParams(
            dimension_semantics=("parallel", "parallel"),
            vmem_limit_bytes=_vmem_limit()),
    )(xn, xn)
    return sim[:n, :n]


# ----------------------------------------------------------------------------------------------
# Plain-JAX glue (large-N path) and forward wrapper.
# ----------------------------------------------------------------------------------------------
def _pair_losses(sim, y_true, n_negative):
    """Positive / negative pair losses from a cosine-similarity matrix (large-N glue path)."""
    n = sim.shape[0]
    sim = sim.astype(jnp.float32)
    i_ids = jnp.arange(n)[:, None]
    j_ids = jnp.arange(n)[None, :]
    upper = i_ids < j_ids                                   # combinations(range(N), 2), i < j
    same = y_true[:, None] == y_true[None, :]

    pos_mask = upper & same
    n_pos = jnp.sum(pos_mask)
    pos_sum = jnp.sum(jnp.where(pos_mask, 1.0 - sim, 0.0))
    loss_pos = jnp.where(n_pos > 0, pos_sum / jnp.maximum(n_pos, 1).astype(jnp.float32), 0.0)

    # TODO(synk): original compute_negative_loss tests `pair not in self.compute_positive_loss`
    # (a bound method) and forward passes len(0-dim tensor) -- both TypeErrors in PyTorch; we
    # implement the evident intent: different-label pairs in combinations order, truncated to the
    # first n_negative, loss = mean(max(0, cos_sim)).
    neg_mask = (upper & jnp.logical_not(same)).reshape(-1)  # row-major == combinations order
    rank = jnp.cumsum(neg_mask.astype(jnp.int32))
    sel = neg_mask & (rank <= n_negative)
    n_sel = jnp.sum(sel)
    neg_sum = jnp.sum(jnp.where(sel, jnp.maximum(sim.reshape(-1), 0.0), 0.0))
    loss_neg = jnp.where(n_sel > 0, neg_sum / jnp.maximum(n_sel, 1).astype(jnp.float32), 0.0)
    return loss_pos, loss_neg


def contrastive_loss_forward(xs, y_preds, y_true, class_weight=None, n_negative=16,
                             use_contrastive_loss=False, fused_max_n=512):
    """Mirror of ContrastiveLoss.forward."""
    n, c = y_preds.shape
    if class_weight is None:
        class_weight = jnp.ones((c,), jnp.float32)
    if not use_contrastive_loss or n < 2:
        return cross_entropy_pallas(y_preds, y_true, class_weight)
    if n <= fused_max_n:
        # Single fused pallas_call: no sim HBM round-trip, no extra tiny XLA ops.
        return fused_contrastive_loss_pallas(xs, y_preds, y_true, class_weight, n_negative)
    loss_ce = cross_entropy_pallas(y_preds, y_true, class_weight)
    sim = cosine_sim_matrix_pallas(xs)
    loss_pos, loss_neg = _pair_losses(sim, y_true, n_negative)
    return loss_ce + loss_pos + loss_neg


def _reference_forward(xs, y_preds, y_true, class_weight, n_negative, use_contrastive_loss):
    """Pure-JAX f32 reference for correctness checking."""
    logits = y_preds.astype(jnp.float32)
    lse = jax.nn.logsumexp(logits, axis=1)
    true_logit = jnp.take_along_axis(logits, y_true[:, None], axis=1)[:, 0]
    nll = lse - true_logit
    sw = class_weight[y_true]
    loss_ce = jnp.sum(sw * nll) / jnp.sum(sw)
    if not use_contrastive_loss:
        return loss_ce
    x = xs.astype(jnp.float32)
    norms = jnp.sqrt(jnp.sum(x * x, axis=1, keepdims=True))
    xn = x / jnp.maximum(norms, _EPS)                       # per-vector eps clamp (PyTorch)
    sim = xn @ xn.T
    lp, ln = _pair_losses(sim, y_true, n_negative)
    return loss_ce + lp + ln


if __name__ == "__main__":
    key = jax.random.PRNGKey(0)
    k1, k2, k3, k4, k5, k6, k7, k8 = jax.random.split(key, 8)

    # --- small batch: fused single-call path + CE-only path ---
    N, D, C = 8, 32, 4
    xs = jax.random.normal(k1, (N, D), dtype=jnp.float32)
    y_preds = jax.random.normal(k2, (N, C), dtype=jnp.float32)
    y_true = jax.random.randint(k3, (N,), 0, C, dtype=jnp.int32)
    class_weight = 1.0 + 0.1 * jnp.arange(C, dtype=jnp.float32)

    loss_ce_only = contrastive_loss_forward(xs, y_preds, y_true, class_weight,
                                            n_negative=16, use_contrastive_loss=False)
    loss_total = contrastive_loss_forward(xs, y_preds, y_true, class_weight,
                                          n_negative=16, use_contrastive_loss=True)

    # --- medium batch: force the tiled CE kernel + tiled cosine-sim kernel (large-N path) ---
    N2, D2 = 200, 128
    xs2 = jax.random.normal(k4, (N2, D2), dtype=jnp.float32)
    y_preds2 = jax.random.normal(k5, (N2, C), dtype=jnp.float32)
    y_true2 = jax.random.randint(k6, (N2,), 0, C, dtype=jnp.int32)
    loss_total2 = contrastive_loss_forward(xs2, y_preds2, y_true2, class_weight,
                                           n_negative=16, use_contrastive_loss=True,
                                           fused_max_n=64)  # force the tiled large-N path

    # --- CE with several row tiles: exercises the 2-way core split, the partial last tile and
    #     the clamped/duplicated trailing tile in _ce_kernel_tiled ---
    N3 = 300
    y_preds3 = jax.random.normal(k7, (N3, C), dtype=jnp.float32)
    y_true3 = jax.random.randint(k8, (N3,), 0, C, dtype=jnp.int32)
    loss_ce3 = cross_entropy_pallas(y_preds3, y_true3, class_weight, max_rows_per_tile=128)

    jax.block_until_ready((loss_ce_only, loss_total, loss_total2, loss_ce3))

    ref_ce = _reference_forward(xs, y_preds, y_true, class_weight, 16, False)
    ref_total = _reference_forward(xs, y_preds, y_true, class_weight, 16, True)
    ref_total2 = _reference_forward(xs2, y_preds2, y_true2, class_weight, 16, True)
    ref_ce3 = _reference_forward(y_preds3, y_preds3, y_true3, class_weight, 16, False)

    assert jnp.allclose(loss_ce_only, ref_ce, rtol=1e-3, atol=1e-3), (loss_ce_only, ref_ce)
    assert jnp.allclose(loss_total, ref_total, rtol=5e-3, atol=5e-3), (loss_total, ref_total)
    assert jnp.allclose(loss_total2, ref_total2, rtol=1e-2, atol=1e-2), (loss_total2, ref_total2)
    assert jnp.allclose(loss_ce3, ref_ce3, rtol=1e-3, atol=1e-3), (loss_ce3, ref_ce3)
    assert bool(jnp.isfinite(loss_total)) and bool(jnp.isfinite(loss_total2))
    assert bool(jnp.isfinite(loss_ce3))

    print("KERNEL_OK")
</pallas_src>

<mosaic_0001>
module attributes {stable_mosaic.version = 11 : i64} {
  func.func @_ce_kernel_tiled(%arg0: i32, %arg1: i32, %arg2: memref<8x4xf32, #tpu.memory_space<vmem>>, %arg3: memref<8x1xi32, #tpu.memory_space<vmem>>, %arg4: memref<1x4xf32, #tpu.memory_space<vmem>>, %arg5: memref<1x8x128xf32, #tpu.memory_space<vmem>>, %arg6: memref<2xf32, #tpu.memory_space<smem>>) attributes {dimension_semantics = [#tpu.dimension_semantics<parallel>, #tpu.dimension_semantics<arbitrary>], iteration_bounds = array<i64: 1, 1>, scalar_prefetch = 0 : i64, scratch_operands = 1 : i64, tpu.core_type = #tpu.core_type<tc>, window_params = [{transform_indices = @transform_0, window_bounds = array<i64: 8, 4>}, {transform_indices = @transform_1, window_bounds = array<i64: 8, 1>}, {pipeline_mode = #tpu.pipeline_mode<synchronous>, transform_indices = @transform_2, window_bounds = array<i64: 1, 4>}, {transform_indices = @transform_3, window_bounds = array<i64: 1, 8, 128>}]} {
    %c0_i32 = arith.constant 0 : i32
    %0 = arith.cmpi eq, %arg1, %c0_i32 : i32
    %1 = arith.extui %0 : i1 to i32
    %c0_i32_0 = arith.constant 0 : i32
    %2 = arith.cmpi ne, %1, %c0_i32_0 : i32
    scf.if %2 {
      %cst_19 = arith.constant 0.000000e+00 : f32
      %c0_20 = arith.constant 0 : index
      %58 = memref.load %arg6[%c0_20] : memref<2xf32, #tpu.memory_space<smem>>
      memref.store %cst_19, %arg6[%c0_20] : memref<2xf32, #tpu.memory_space<smem>>
      %cst_21 = arith.constant 0.000000e+00 : f32
      %c1_22 = arith.constant 1 : index
      %59 = memref.load %arg6[%c1_22] : memref<2xf32, #tpu.memory_space<smem>>
      memref.store %cst_21, %arg6[%c1_22] : memref<2xf32, #tpu.memory_space<smem>>
    } else {
    }
    %c0 = arith.constant 0 : index
    %c0_1 = arith.constant 0 : index
    %3 = vector.load %arg2[%c0, %c0_1] : memref<8x4xf32, #tpu.memory_space<vmem>>, vector<8x4xf32>
    %c0_2 = arith.constant 0 : index
    %c0_3 = arith.constant 0 : index
    %4 = vector.load %arg3[%c0_2, %c0_3] : memref<8x1xi32, #tpu.memory_space<vmem>>, vector<8x1xi32>
    %c0_4 = arith.constant 0 : index
    %c0_5 = arith.constant 0 : index
    %5 = vector.load %arg4[%c0_4, %c0_5] : memref<1x4xf32, #tpu.memory_space<vmem>>, vector<1x4xf32>
    %c1_i32 = arith.constant 1 : i32
    %6 = arith.muli %arg0, %c1_i32 : i32
    %7 = arith.addi %6, %arg1 : i32
    %c8_i32 = arith.constant 8 : i32
    %8 = arith.muli %7, %c8_i32 : i32
    %9 = tpu.iota {dimensions = array<i32: 0>} : vector<8x1xi32>
    %10 = vector.broadcast %8 : i32 to vector<8x1xi32>
    %11 = arith.addi %10, %9 : vector<8x1xi32>
    %c8_i32_6 = arith.constant 8 : i32
    %12 = vector.broadcast %c8_i32_6 : i32 to vector<8x1xi32>
    %13 = arith.cmpi slt, %11, %12 : vector<8x1xi32>
    %14 = tpu.iota {dimensions = array<i32: 1>} : vector<8x4xi32>
    %15 = vector.broadcast %4 : vector<8x1xi32> to vector<8x4xi32>
    %16 = arith.cmpi eq, %14, %15 : vector<8x4xi32>
    %17 = arith.extui %16 : vector<8x4xi1> to vector<8x4xi32>
    %18 = arith.sitofp %17 : vector<8x4xi32> to vector<8x4xf32>
    %cst = arith.constant dense<0xFF800000> : vector<8xf32>
    %19 = vector.multi_reduction <maximumf>, %3, %cst [1] : vector<8x4xf32> to vector<8xf32>
    %20 = vector.shape_cast %19 : vector<8xf32> to vector<8x1xf32>
    %21 = vector.broadcast %20 : vector<8x1xf32> to vector<8x4xf32>
    %22 = arith.subf %3, %21 : vector<8x4xf32>
    %23 = math.exp %22 : vector<8x4xf32>
    %cst_7 = arith.constant dense<0.000000e+00> : vector<8xf32>
    %24 = vector.multi_reduction <add>, %23, %cst_7 [1] : vector<8x4xf32> to vector<8xf32>
    %25 = vector.shape_cast %24 : vector<8xf32> to vector<8x1xf32>
    %26 = math.log %25 : vector<8x1xf32>
    %27 = arith.addf %20, %26 : vector<8x1xf32>
    %28 = arith.mulf %3, %18 : vector<8x4xf32>
    %cst_8 = arith.constant dense<0.000000e+00> : vector<8xf32>
    %29 = vector.multi_reduction <add>, %28, %cst_8 [1] : vector<8x4xf32> to vector<8xf32>
    %30 = vector.shape_cast %29 : vector<8xf32> to vector<8x1xf32>
    %31 = arith.subf %27, %30 : vector<8x1xf32>
    %32 = vector.broadcast %5 : vector<1x4xf32> to vector<8x4xf32>
    %33 = arith.mulf %18, %32 : vector<8x4xf32>
    %cst_9 = arith.constant dense<0.000000e+00> : vector<8xf32>
    %34 = vector.multi_reduction <add>, %33, %cst_9 [1] : vector<8x4xf32> to vector<8xf32>
    %35 = vector.shape_cast %34 : vector<8xf32> to vector<8x1xf32>
    %c0_10 = arith.constant 0 : index
    %36 = memref.load %arg6[%c0_10] : memref<2xf32, #tpu.memory_space<smem>>
    %37 = arith.mulf %35, %31 : vector<8x1xf32>
    %cst_11 = arith.constant 0.000000e+00 : f32
    %38 = vector.broadcast %cst_11 : f32 to vector<8x1xf32>
    %39 = arith.select %13, %37, %38 : vector<8x1xi1>, vector<8x1xf32>
    %40 = vector.shape_cast %39 : vector<8x1xf32> to vector<1x8x1xf32>
    %cst_12 = arith.constant dense<0.000000e+00> : vector<1xf32>
    %41 = vector.multi_reduction <add>, %40, %cst_12 [1, 2] : vector<1x8x1xf32> to vector<1xf32>
    %42 = vector.shape_cast %41 : vector<1xf32> to vector<1x1x1xf32>
    %43 = vector.extract %42[0, 0, 0] : f32 from vector<1x1x1xf32>
    %44 = arith.addf %36, %43 : f32
    %c0_13 = arith.constant 0 : index
    %45 = memref.load %arg6[%c0_13] : memref<2xf32, #tpu.memory_space<smem>>
    memref.store %44, %arg6[%c0_13] : memref<2xf32, #tpu.memory_space<smem>>
    %c1 = arith.constant 1 : index
    %46 = memref.load %arg6[%c1] : memref<2xf32, #tpu.memory_space<smem>>
    %cst_14 = arith.constant 0.000000e+00 : f32
    %47 = vector.broadcast %cst_14 : f32 to vector<8x1xf32>
    %48 = arith.select %13, %35, %47 : vector<8x1xi1>, vector<8x1xf32>
    %49 = vector.shape_cast %48 : vector<8x1xf32> to vector<1x8x1xf32>
    %cst_15 = arith.constant dense<0.000000e+00> : vector<1xf32>
    %50 = vector.multi_reduction <add>, %49, %cst_15 [1, 2] : vector<1x8x1xf32> to vector<1xf32>
    %51 = vector.shape_cast %50 : vector<1xf32> to vector<1x1x1xf32>
    %52 = vector.extract %51[0, 0, 0] : f32 from vector<1x1x1xf32>
    %53 = arith.addf %46, %52 : f32
    %c1_16 = arith.constant 1 : index
    %54 = memref.load %arg6[%c1_16] : memref<2xf32, #tpu.memory_space<smem>>
    memref.store %53, %arg6[%c1_16] : memref<2xf32, #tpu.memory_space<smem>>
    %c0_i32_17 = arith.constant 0 : i32
    %55 = arith.cmpi eq, %arg1, %c0_i32_17 : i32
    %56 = arith.extui %55 : i1 to i32
    %c0_i32_18 = arith.constant 0 : i32
    %57 = arith.cmpi ne, %56, %c0_i32_18 : i32
    scf.if %57 {
      %58 = tpu.iota {dimensions = array<i32: 1>} : vector<1x8x128xi32>
      %59 = tpu.iota {dimensions = array<i32: 2>} : vector<1x8x128xi32>
      %c0_i32_19 = arith.constant 0 : i32
      %60 = vector.broadcast %c0_i32_19 : i32 to vector<1x8x128xi32>
      %61 = arith.cmpi eq, %58, %60 : vector<1x8x128xi32>
      %c0_i32_20 = arith.constant 0 : i32
      %62 = vector.broadcast %c0_i32_20 : i32 to vector<1x8x128xi32>
      %63 = arith.cmpi eq, %59, %62 : vector<1x8x128xi32>
      %64 = arith.andi %61, %63 : vector<1x8x128xi1>
      %c0_21 = arith.constant 0 : index
      %65 = memref.load %arg6[%c0_21] : memref<2xf32, #tpu.memory_space<smem>>
      %c0_i32_22 = arith.constant 0 : i32
      %66 = vector.broadcast %c0_i32_22 : i32 to vector<1x8x128xi32>
      %67 = arith.cmpi eq, %58, %66 : vector<1x8x128xi32>
      %c1_i32_23 = arith.constant 1 : i32
      %68 = vector.broadcast %c1_i32_23 : i32 to vector<1x8x128xi32>
      %69 = arith.cmpi eq, %59, %68 : vector<1x8x128xi32>
      %70 = arith.andi %67, %69 : vector<1x8x128xi1>
      %c1_24 = arith.constant 1 : index
      %71 = memref.load %arg6[%c1_24] : memref<2xf32, #tpu.memory_space<smem>>
      %cst_25 = arith.constant 0.000000e+00 : f32
      %72 = vector.broadcast %71 : f32 to vector<1x8x128xf32>
      %73 = vector.broadcast %cst_25 : f32 to vector<1x8x128xf32>
      %74 = arith.select %70, %72, %73 : vector<1x8x128xi1>, vector<1x8x128xf32>
      %75 = vector.broadcast %65 : f32 to vector<1x8x128xf32>
      %76 = arith.select %64, %75, %74 : vector<1x8x128xi1>, vector<1x8x128xf32>
      %c0_26 = arith.constant 0 : index
      %c0_27 = arith.constant 0 : index
      %c0_28 = arith.constant 0 : index
      %77 = vector.load %arg5[%c0_26, %c0_27, %c0_28] : memref<1x8x128xf32, #tpu.memory_space<vmem>>, vector<1x8x128xf32>
      tpu.vector_store %arg5[%c0_26, %c0_27, %c0_28], %76 {strides = array<i32>} : memref<1x8x128xf32, #tpu.memory_space<vmem>>, vector<1x8x128xf32>,
    } else {
    }
    return
  }
  func.func @transform_0(%arg0: i32, %arg1: i32) -> (i32, i32) {
    %c1_i32 = arith.constant 1 : i32
    %0 = arith.muli %arg0, %c1_i32 : i32
    %1 = arith.addi %0, %arg1 : i32
    %c0_i32 = arith.constant 0 : i32
    %2 = arith.minsi %1, %c0_i32 : i32
    %c0_i32_0 = arith.constant 0 : i32
    %c0_i32_1 = arith.constant 0 : i32
    return %2, %c0_i32_0 : i32, i32
  }
  func.func @transform_1(%arg0: i32, %arg1: i32) -> (i32, i32) {
    %c1_i32 = arith.constant 1 : i32
    %0 = arith.muli %arg0, %c1_i32 : i32
    %1 = arith.addi %0, %arg1 : i32
    %c0_i32 = arith.constant 0 : i32
    %2 = arith.minsi %1, %c0_i32 : i32
    %c0_i32_0 = arith.constant 0 : i32
    %c0_i32_1 = arith.constant 0 : i32
    return %2, %c0_i32_0 : i32, i32
  }
  func.func @transform_2(%arg0: i32, %arg1: i32) -> (i32, i32) {
    %c0_i32 = arith.constant 0 : i32
    %c0_i32_0 = arith.constant 0 : i32
    %c0_i32_1 = arith.constant 0 : i32
    return %c0_i32, %c0_i32_0 : i32, i32
  }
  func.func @transform_3(%arg0: i32, %arg1: i32) -> (i32, i32, i32) {
    %c0_i32 = arith.constant 0 : i32
    %c0_i32_0 = arith.constant 0 : i32
    %c0_i32_1 = arith.constant 0 : i32
    return %arg0, %c0_i32, %c0_i32_0 : i32, i32, i32
  }
}

</mosaic_0001>

<llo_original>
// kernel: tpu_custom_call.1
$region0: #{tpu_custom_call.1}
  #allocation0 [shape = 'u32[]', space=smem, size = 0x4, offset = 0x4, fixed_abs, tag = 'smem constant byte address 0x4 - core index']
  #allocation1 [shape = 'u32[144,128]{1,0:T(1,128)}', space=vmem, size = 0x12000, scoped, tag = 'internal scratch']
  #allocation2 [shape = 'f32[2]{0:T(128)}', space=smem, size = 0x200, scoped, tag = 'scratch operand']
  %s0 = inlined_call_operand.vmem [shape: f32[8,4], index: 0, kind: input, shape index: {}]
  %s1 = inlined_call_operand.vmem [shape: s32[8,1], index: 1, kind: input, shape index: {}]
  %s2 = inlined_call_operand.vmem [shape: f32[1,4], index: 2, kind: input, shape index: {}]
  %s3 = inlined_call_operand.hbm [shape: f32[1,8,128], index: 3, kind: output, shape index: {}]
  %s4 = sld [smem:[#allocation0]]
  $region30: #{tpu_custom_call.1} parent=0
    _
  %s6 = ssub.s32 1, %s4
  %s7 = scalar_select 0, %s6, %s4
  $region1: #{tpu_custom_call.1} parent=0
    #allocation3 [shape = 'u8[4096]{0}', space=vmem, size = 0x1000, scoped, tag = 'output window, operand 0, single buffered']
    #allocation4 [shape = 's32[1]{0}', space=sflag, size = 0x4, scoped, tag = 'scoped memory for tpu_custom_call.1']
    %8 = vsyncpa [#allocation4], 0
    // Predicated region
    $region2: #{tpu_custom_call.1} parent=1 // pred_check
      _
    $region3: #{tpu_custom_call.1} parent=1 // pred_check_branch
      %10 = sbr.rel (0) target = $region5
    $region4: #{tpu_custom_call.1} parent=1 // pred_region
      %s11 = sadd.s32 0, 0
      %p12 = scmp.lt.s32.totalorder %s11, 0
      %s13 = scalar_select %p12, %s11, 0
      %p14 = scmp.lt.s32.totalorder %s13, 0
      %s15 = scalar_select %p14, %s13, 0
      %s16 = smul.addr %s15, 8
      %s17 = scalar_lea.vmem %s0, %s16
      %s18 = sadd.s32 0, 0
      %p19 = scmp.lt.s32.totalorder %s18, 0
      %s20 = scalar_select %p19, %s18, 0
    $region5: #{tpu_custom_call.1} parent=1 // pred_fallthru
      _
    // Predicated region
    $region6: #{tpu_custom_call.1} parent=1 // pred_check
      _
    $region7: #{tpu_custom_call.1} parent=1 // pred_check_branch
      %22 = sbr.rel (0) target = $region9
    $region8: #{tpu_custom_call.1} parent=1 // pred_region
      %s23 = sadd.s32 0, 0
      %p24 = scmp.lt.s32.totalorder %s23, 0
      %s25 = scalar_select %p24, %s23, 0
      %p26 = scmp.lt.s32.totalorder %s25, 0
      %s27 = scalar_select %p26, %s25, 0
      %s28 = smul.addr %s27, 8
      %s29 = scalar_lea.vmem %s1, %s28
      %s30 = sadd.s32 0, 0
      %p31 = scmp.lt.s32.totalorder %s30, 0
      %s32 = scalar_select %p31, %s30, 0
    $region9: #{tpu_custom_call.1} parent=1 // pred_fallthru
      _
    // Predicated region
    $region10: #{tpu_custom_call.1} parent=1 // pred_check
      _
    $region11: #{tpu_custom_call.1} parent=1 // pred_check_branch
      %34 = sbr.rel (0) target = $region13
    $region12: #{tpu_custom_call.1} parent=1 // pred_region
      _
    $region13: #{tpu_custom_call.1} parent=1 // pred_fallthru
      _
    %s35 = sadd.s32 0, 0
    %p36 = scmp.lt.s32.totalorder %s35, 0
    %s37 = scalar_select %p36, %s35, 0
    %p38 = scmp.lt.s32.totalorder %s37, 0
    %s39 = scalar_select %p38, %s37, 0
    %s40 = smul.addr %s39, 8
    %s41 = scalar_lea.vmem %s0, %s40
    %s42 = sadd.s32 0, 0
    %p43 = scmp.lt.s32.totalorder %s42, 0
    %s44 = scalar_select %p43, %s42, 0
    %p45 = scmp.lt.s32.totalorder %s44, 0
    %s46 = scalar_select %p45, %s44, 0
    %s47 = smul.addr %s46, 8
    %s48 = scalar_lea.vmem %s1, %s47
    %s49 = sadd.s32 0, 0
    %p50 = scmp.lt.s32.totalorder %s49, 0
    %s51 = scalar_select %p50, %s49, 0
    %p52 = scmp.lt.s32.totalorder %s51, 0
    %s53 = scalar_select %p52, %s51, 0
    %s54 = smul.addr %s53, 8
    %s55 = scalar_lea.vmem %s0, %s54
    %s56 = sadd.s32 0, 0
    %p57 = scmp.lt.s32.totalorder %s56, 0
    %s58 = scalar_select %p57, %s56, 0
    %s59 = sadd.s32 0, 0
    %p60 = scmp.lt.s32.totalorder %s59, 0
    %s61 = scalar_select %p60, %s59, 0
    %p62 = scmp.lt.s32.totalorder %s61, 0
    %s63 = scalar_select %p62, %s61, 0
    %s64 = smul.addr %s63, 8
    %s65 = scalar_lea.vmem %s1, %s64
    %s66 = sadd.s32 0, 0
    %p67 = scmp.lt.s32.totalorder %s66, 0
    %s68 = scalar_select %p67, %s66, 0
    %p69 = scmp.eq.s32.totalorder 0, 0
    // Predicated region
    $region14: #{tpu_custom_call.1} parent=1 // pred_check
      %p70 = pneg %p69
    $region15: #{tpu_custom_call.1} parent=1 // pred_check_branch
      %72 = sbr.rel (%p70) target = $region17
    $region16: #{tpu_custom_call.1} parent=1 // pred_region
      %s73 = scalar_lea.smem [#allocation2], 0
      %74 = sst [smem:[%s73]] 0.0
      %s75 = scalar_lea.smem [#allocation2], 1
      %76 = sst [smem:[%s75]] 0.0
    $region17: #{tpu_custom_call.1} parent=1 // pred_fallthru
      _
    %v77 = vld [vmem:[%s55] sm:$0xff]
    %v78 = vld [vmem:[%s65] sm:$0xff]
    %v79 = vld [vmem:[%s2] sm:$0x1]
    %s80 = sadd.s32 0, 0
    %s81 = smul.u32 %s80, 8
    %v82 = vlaneseq
    %v83 = vshrl.u32 %v82, 7
    %v84 = vstv %s81
    %v85 = vadd.s32 %v84, %v83
    %vm86 = vcmp.lt.s32.totalorder %v85, 8
    %v87 = vlaneseq
    %v88 = vand.u32 %v87, 127
    %89 = vset.pattern.permute.xlu0 0
    %90 = vperm.xlu0 %89, %v78
    %v91 = vpop.permute.xlu0 %90
    %vm92 = vcmp.eq.s32.totalorder %v88, %v91
    %v93 = vsel %vm92, 1, 0
    %v94 = vcvt.s32.f32 %v93
    %vm95 = vcmask 31744
    %v96 = vsel %vm95, %v77, -inf
    %97 = vmax.xlane.f32.xlu0 %v96
    %v98 = vpop.xlane.xlu0 %97
    %v99 = vsub.f32 %v77, %v98
    %v100 = vmul.f32 %v99, 1.442695
    %v101 = vpow.pop %v100
    %v102 = vsel %vm95, %v101, 0.0
    %103 = vadd.xlane.f32.xlu0 %v102
    %v104 = vpop.xlane.xlu0 %103
    %v105 = vlog2.pop %v104
    %v106 = vmul.f32 %v105, 0.6931472
    %v107 = vadd.f32 %v98, %v106
    %v108 = vmul.f32 %v77, %v94
    %v109 = vsel %vm95, %v108, 0.0
    %110 = vadd.xlane.f32.xlu0 %v109
    %v111 = vpop.xlane.xlu0 %110
    %v112 = vsub.f32 %v107, %v111
    %v114 = vlaneseq
    %v115 = vshrl.u32 %v114, 7
    %v116 = vsub.s32 0, %v115
    %v117 = vrot.slane %v79, %v116
    %v119 = vmul.f32 %v94, %v117
    %v120 = vsel %vm95, %v119, 0.0
    %121 = vadd.xlane.f32.xlu0 %v120
    %v122 = vpop.xlane.xlu0 %121
    %s123 = sld [smem:[#allocation2]]
    %v124 = vmul.f32 %v122, %v112
    %v125 = vsel %vm86, %v124, 0.0
    %vm126 = vcmask 7168
    %v127 = vsel %vm126, %v125, 0.0
    %128 = vadd.xlane.f32.xlu0 %v127
    %v129 = vpop.xlane.xlu0 %128
    %v130 = vrot.slane %v129, 4
    %v131 = vadd.f32 %v129, %v130
    %v132 = vrot.slane %v131, 2
    %v133 = vadd.f32 %v131, %v132
    %v134 = vrot.slane %v133, 1
    %v135 = vadd.f32 %v133, %v134
    %s136 = vtos %v135
    %s137 = sadd.f32 %s123, %s136
    %s138 = scalar_lea.smem [#allocation2], 0
    %139 = sst [smem:[%s138]] %s137
    %s140 = sld [smem:[#allocation2 + $0x1]]
    %v141 = vsel %vm86, %v122, 0.0
    %v142 = vsel %vm126, %v141, 0.0
    %143 = vadd.xlane.f32.xlu0 %v142
    %v144 = vpop.xlane.xlu0 %143
    %v145 = vrot.slane %v144, 4
    %v146 = vadd.f32 %v144, %v145
    %v147 = vrot.slane %v146, 2
    %v148 = vadd.f32 %v146, %v147
    %v149 = vrot.slane %v148, 1
    %v150 = vadd.f32 %v148, %v149
    %s151 = vtos %v150
    %s152 = sadd.f32 %s140, %s151
    %s153 = scalar_lea.smem [#allocation2], 1
    %154 = sst [smem:[%s153]] %s152
    // Predicated region
    $region18: #{tpu_custom_call.1} parent=1 // pred_check
      %p155 = pneg %p69
    $region19: #{tpu_custom_call.1} parent=1 // pred_check_branch
      %157 = sbr.rel (%p155) target = $region21
    $region20: #{tpu_custom_call.1} parent=1 // pred_region
      %vm158 = vcmp.eq.s32.totalorder %v83, 0
      %vm159 = vcmp.eq.s32.totalorder %v88, 0
      %vm160 = vmand %vm158, %vm159
      %s161 = sld [smem:[#allocation2]]
      %vm162 = vcmp.eq.s32.totalorder %v88, 1
      %vm163 = vmand %vm158, %vm162
      %s164 = sld [smem:[#allocation2 + $0x1]]
      %v165 = vstv %s164
      %v166 = vsel %vm163, %v165, 0.0
      %v167 = vstv %s161
      %v168 = vsel %vm160, %v167, %v166
      %169 = vst [vmem:[#allocation3] sm:$0xff] %v168
    $region21: #{tpu_custom_call.1} parent=1 // pred_fallthru
      _
    // Predicated region
    $region22: #{tpu_custom_call.1} parent=1 // pred_check
      _
    $region23: #{tpu_custom_call.1} parent=1 // pred_check_branch
      %171 = sbr.rel (0) target = $region25
    $region24: #{tpu_custom_call.1} parent=1 // pred_region
      %s173 = ssub.s32 128, 128
      %174 = vsyncadd [#allocation4], %s173
      %s176 = sshll.u32 [#allocation3], 4
      %s177 = int_to_ptr.vmem [resolvable:$true] %s176
      %179 = dma.vmem_to_hbm [thread:$0]  %s177, 128, %s3, [#allocation4]
    $region25: #{tpu_custom_call.1} parent=1 // pred_fallthru
      _
    // Predicated region
    $region26: #{tpu_custom_call.1} parent=1 // pred_check
      _
    $region27: #{tpu_custom_call.1} parent=1 // pred_check_branch
      %181 = sbr.rel (0) target = $region29
    $region28: #{tpu_custom_call.1} parent=1 // pred_region
      %182 = dma.done [#allocation4], 128
    $region29: #{tpu_custom_call.1} parent=1 // pred_fallthru
      _
    %183 = vsyncpa [#allocation4], 1

</llo_original>
